<compile_context>
chip_gen: v5e
topology: v5e:2x2
jax: 0.10.0
libtpu: 0.0.40
codegen_flags: <defaults>
</compile_context>

<pallas_src>
import functools

import jax
import jax.numpy as jnp
from jax.experimental import pallas as pl
from jax.experimental.pallas import tpu as pltpu

SUBLANE = 8  # sublane width (second-to-last-dim tiling unit)


def _round_up(x, m):
    return (x + m - 1) // m * m


def mlp_kernel(x_ref, w1_ref, b1_ref, w2_ref, b2_ref, wo_ref, bo_ref, o_ref):
    """Fused  relu( relu(x@W1+b1) @ W2 + b2 ) @ Wo + bo  on one batch tile.

    x arrives f32 (cast to bf16 here), weights are bf16 (MXU inputs),
    accumulation is f32 via preferred_element_type, bias-add / ReLU stay f32
    (v5e VPU has no bf16).
    """
    x = x_ref[...].astype(jnp.bfloat16)
    # ---- main: Linear -> ReLU -> Linear ----
    h = jnp.dot(x, w1_ref[...], preferred_element_type=jnp.float32)
    h = jnp.maximum(h + b1_ref[...], 0.0)
    h = jnp.dot(h.astype(jnp.bfloat16), w2_ref[...],
                preferred_element_type=jnp.float32)
    # ---- forward: relu(main(x)) then final linear ----
    h = jnp.maximum(h + b2_ref[...], 0.0)
    y = jnp.dot(h.astype(jnp.bfloat16), wo_ref[...],
                preferred_element_type=jnp.float32)
    o_ref[...] = (y + bo_ref[...]).astype(o_ref.dtype)


def mlp_forward(x, params, *, tb=512):
    """x: (B, in_features) f32.

    params (kernel-ready, produced once by init_params / prepare_params):
      w1 (in, hid) bf16, b1 (1, hid) f32,
      w2 (hid, hid) bf16, b2 (1, hid) f32,
      wo (hid, out) bf16, bo (1, out) f32.
    Returns (B, out_features) f32.
    """
    B, in_features = x.shape
    hid = params["w1"].shape[1]
    out_features = params["wo"].shape[1]

    # --- batch tile selection ---------------------------------------------
    # Multiple of 8 sublanes, large enough to amortize per-grid-step overhead
    # (~0.35 us/step), but clamped so the parallel batch axis keeps >= 2 grid
    # steps when the batch allows (v7x shards parallel axes across its 2 TCs).
    tb = _round_up(max(int(tb), SUBLANE), SUBLANE)
    if B >= 2 * SUBLANE:
        tb = min(tb, _round_up(pl.cdiv(B, 2), SUBLANE))
    tb = min(tb, _round_up(B, SUBLANE))

    b_p = _round_up(B, tb)
    if b_p != B:
        # Zero-pad only the batch rows (exact: extra rows are sliced off below).
        x = jnp.pad(x, ((0, b_p - B), (0, 0)))

    row = lambda i: (i, 0)   # batch-tiled arrays (x, out)
    rep = lambda i: (0, 0)   # resident arrays (weights, biases)

    # Resident data: constant index_map => one VMEM buffer is enough.  Use
    # single-buffering when this jax version supports it (explicit check, not
    # a broad try/except).
    if hasattr(pl, "Buffered"):
        def resident(shape):
            return pl.BlockSpec(shape, rep, pipeline_mode=pl.Buffered(1))
    else:
        def resident(shape):
            return pl.BlockSpec(shape, rep)

    grid_spec = pltpu.PrefetchScalarGridSpec(
        num_scalar_prefetch=0,
        grid=(b_p // tb,),
        in_specs=[
            # x tile: last block dim == full array dim (32), so no lane pad
            # needed; streamed / double-buffered.
            pl.BlockSpec((tb, in_features), row),
            resident((in_features, hid)),     # W1 (bf16)
            resident((1, hid)),               # b1 (f32)
            resident((hid, hid)),             # W2 (bf16)
            resident((1, hid)),               # b2 (f32)
            resident((hid, out_features)),    # W_out (bf16)
            resident((1, out_features)),      # b_out (f32)
        ],
        # Output un-padded: last block dim == full array dim (out_features).
        out_specs=pl.BlockSpec((tb, out_features), row),
    )

    flops = 2 * b_p * (in_features * hid + hid * hid + hid * out_features)
    bytes_accessed = (
        b_p * in_features * 4                                   # x (f32)
        + 2 * (in_features * hid + hid * hid + hid * out_features)  # weights bf16
        + 4 * (hid + hid + out_features)                        # biases f32
        + b_p * out_features * 4                                # out (f32)
    )

    out = pl.pallas_call(
        mlp_kernel,
        out_shape=jax.ShapeDtypeStruct((b_p, out_features), jnp.float32),
        grid_spec=grid_spec,
        compiler_params=pltpu.CompilerParams(
            dimension_semantics=("parallel",),   # megacore-shardable batch axis
            vmem_limit_bytes=32 * 1024 * 1024,   # far above need, safe on all gens
        ),
        cost_estimate=pl.CostEstimate(
            flops=flops, transcendentals=0, bytes_accessed=bytes_accessed),
    )(x, params["w1"], params["b1"], params["w2"], params["b2"],
      params["wo"], params["bo"])

    return out[:B] if b_p != B else out


def init_params(key, in_features, hidden_features, out_features):
    """Deterministic synthetic init (PyTorch-Linear-style uniform fan-in scaling).

    Weights are stored pre-transposed as (fan_in, fan_out) and pre-cast to
    bf16 ONCE here (kernel-ready), so the forward wrapper does no per-call
    pad/convert work on constant data.  Biases stay f32.
    """
    ks = jax.random.split(key, 6)

    def lin(kw, kb, fan_in, fan_out):
        bound = 1.0 / jnp.sqrt(fan_in)
        w = jax.random.uniform(kw, (fan_in, fan_out), jnp.float32, -bound, bound)
        b = jax.random.uniform(kb, (1, fan_out), jnp.float32, -bound, bound)
        return w.astype(jnp.bfloat16), b

    w1, b1 = lin(ks[0], ks[1], in_features, hidden_features)
    w2, b2 = lin(ks[2], ks[3], hidden_features, hidden_features)
    wo, bo = lin(ks[4], ks[5], hidden_features, out_features)
    return dict(w1=w1, b1=b1, w2=w2, b2=b2, wo=wo, bo=bo)


def mlp_ref(x, p):
    """Pure-JAX reference matching the PyTorch forward, with the same numerics
    as the kernel (bf16 matmul inputs, f32 accumulation, f32 bias/ReLU)."""
    bf = jnp.bfloat16

    def lin(h, w, b):
        return jnp.dot(h.astype(bf), w.astype(bf),
                       preferred_element_type=jnp.float32) + b

    h = jnp.maximum(lin(x, p["w1"], p["b1"]), 0.0)
    h = jnp.maximum(lin(h, p["w2"], p["b2"]), 0.0)
    return lin(h, p["wo"], p["bo"])


if __name__ == "__main__":
    # Logical module sizes — small, consistent with the module.
    in_features, hidden_features, out_features = 32, 32, 16
    batch = 1024   # with tb=512: 2 parallel grid steps (both v7x TCs get work)

    key = jax.random.PRNGKey(0)
    kx, kp = jax.random.split(key)
    x = jax.random.normal(kx, (batch, in_features), jnp.float32)
    params = init_params(kp, in_features, hidden_features, out_features)

    fwd = jax.jit(functools.partial(mlp_forward, tb=512))
    out = jax.block_until_ready(fwd(x, params))

    ref = mlp_ref(x, params)
    assert out.shape == (batch, out_features)
    assert out.dtype == jnp.float32
    assert jnp.allclose(out, ref, atol=2e-2, rtol=2e-2), "mismatch vs JAX reference"

    print("KERNEL_OK")
</pallas_src>

<mosaic_0001>
module attributes {stable_mosaic.version = 11 : i64} {
  func.func @mlp_kernel(%arg0: i32, %arg1: memref<512x32xf32, #tpu.memory_space<vmem>>, %arg2: memref<32x32xbf16, #tpu.memory_space<vmem>>, %arg3: memref<1x32xf32, #tpu.memory_space<vmem>>, %arg4: memref<32x32xbf16, #tpu.memory_space<vmem>>, %arg5: memref<1x32xf32, #tpu.memory_space<vmem>>, %arg6: memref<32x16xbf16, #tpu.memory_space<vmem>>, %arg7: memref<1x16xf32, #tpu.memory_space<vmem>>, %arg8: memref<512x16xf32, #tpu.memory_space<vmem>>) attributes {dimension_semantics = [#tpu.dimension_semantics<parallel>], iteration_bounds = array<i64: 2>, scalar_prefetch = 0 : i64, scratch_operands = 0 : i64, tpu.core_type = #tpu.core_type<tc>, window_params = [{transform_indices = @transform_0, window_bounds = array<i64: 512, 32>}, {pipeline_mode = #tpu.pipeline_mode<synchronous>, transform_indices = @transform_1, window_bounds = array<i64: 32, 32>}, {pipeline_mode = #tpu.pipeline_mode<synchronous>, transform_indices = @transform_2, window_bounds = array<i64: 1, 32>}, {pipeline_mode = #tpu.pipeline_mode<synchronous>, transform_indices = @transform_3, window_bounds = array<i64: 32, 32>}, {pipeline_mode = #tpu.pipeline_mode<synchronous>, transform_indices = @transform_4, window_bounds = array<i64: 1, 32>}, {pipeline_mode = #tpu.pipeline_mode<synchronous>, transform_indices = @transform_5, window_bounds = array<i64: 32, 16>}, {pipeline_mode = #tpu.pipeline_mode<synchronous>, transform_indices = @transform_6, window_bounds = array<i64: 1, 16>}, {transform_indices = @transform_7, window_bounds = array<i64: 512, 16>}]} {
    %c0 = arith.constant 0 : index
    %c0_0 = arith.constant 0 : index
    %0 = vector.load %arg1[%c0, %c0_0] : memref<512x32xf32, #tpu.memory_space<vmem>>, vector<512x32xf32>
    %1 = arith.truncf %0 : vector<512x32xf32> to vector<512x32xbf16>
    %c0_1 = arith.constant 0 : index
    %c0_2 = arith.constant 0 : index
    %2 = vector.load %arg2[%c0_1, %c0_2] : memref<32x32xbf16, #tpu.memory_space<vmem>>, vector<32x32xbf16>
    %cst = arith.constant dense<0.000000e+00> : vector<512x32xf32>
    %3 = tpu.matmul %1, %2, %cst {dimension_numbers = #tpu.dot_dimension_numbers<[1], [0], [0], [1], [0, 0, 1, 1], [], []>} : vector<512x32xbf16>, vector<32x32xbf16>, vector<512x32xf32> -> vector<512x32xf32>
    %c0_3 = arith.constant 0 : index
    %c0_4 = arith.constant 0 : index
    %4 = vector.load %arg3[%c0_3, %c0_4] : memref<1x32xf32, #tpu.memory_space<vmem>>, vector<1x32xf32>
    %5 = vector.broadcast %4 : vector<1x32xf32> to vector<512x32xf32>
    %6 = arith.addf %3, %5 : vector<512x32xf32>
    %cst_5 = arith.constant 0.000000e+00 : f32
    %7 = vector.broadcast %cst_5 : f32 to vector<512x32xf32>
    %8 = arith.maximumf %6, %7 : vector<512x32xf32>
    %9 = arith.truncf %8 : vector<512x32xf32> to vector<512x32xbf16>
    %c0_6 = arith.constant 0 : index
    %c0_7 = arith.constant 0 : index
    %10 = vector.load %arg4[%c0_6, %c0_7] : memref<32x32xbf16, #tpu.memory_space<vmem>>, vector<32x32xbf16>
    %cst_8 = arith.constant dense<0.000000e+00> : vector<512x32xf32>
    %11 = tpu.matmul %9, %10, %cst_8 {dimension_numbers = #tpu.dot_dimension_numbers<[1], [0], [0], [1], [0, 0, 1, 1], [], []>} : vector<512x32xbf16>, vector<32x32xbf16>, vector<512x32xf32> -> vector<512x32xf32>
    %c0_9 = arith.constant 0 : index
    %c0_10 = arith.constant 0 : index
    %12 = vector.load %arg5[%c0_9, %c0_10] : memref<1x32xf32, #tpu.memory_space<vmem>>, vector<1x32xf32>
    %13 = vector.broadcast %12 : vector<1x32xf32> to vector<512x32xf32>
    %14 = arith.addf %11, %13 : vector<512x32xf32>
    %cst_11 = arith.constant 0.000000e+00 : f32
    %15 = vector.broadcast %cst_11 : f32 to vector<512x32xf32>
    %16 = arith.maximumf %14, %15 : vector<512x32xf32>
    %17 = arith.truncf %16 : vector<512x32xf32> to vector<512x32xbf16>
    %c0_12 = arith.constant 0 : index
    %c0_13 = arith.constant 0 : index
    %18 = vector.load %arg6[%c0_12, %c0_13] : memref<32x16xbf16, #tpu.memory_space<vmem>>, vector<32x16xbf16>
    %cst_14 = arith.constant dense<0.000000e+00> : vector<512x16xf32>
    %19 = tpu.matmul %17, %18, %cst_14 {dimension_numbers = #tpu.dot_dimension_numbers<[1], [0], [0], [1], [0, 0, 1, 1], [], []>} : vector<512x32xbf16>, vector<32x16xbf16>, vector<512x16xf32> -> vector<512x16xf32>
    %c0_15 = arith.constant 0 : index
    %c0_16 = arith.constant 0 : index
    %20 = vector.load %arg7[%c0_15, %c0_16] : memref<1x16xf32, #tpu.memory_space<vmem>>, vector<1x16xf32>
    %21 = vector.broadcast %20 : vector<1x16xf32> to vector<512x16xf32>
    %22 = arith.addf %19, %21 : vector<512x16xf32>
    %c0_17 = arith.constant 0 : index
    %c0_18 = arith.constant 0 : index
    %23 = vector.load %arg8[%c0_17, %c0_18] : memref<512x16xf32, #tpu.memory_space<vmem>>, vector<512x16xf32>
    tpu.vector_store %arg8[%c0_17, %c0_18], %22 {strides = array<i32>} : memref<512x16xf32, #tpu.memory_space<vmem>>, vector<512x16xf32>,
    return
  }
  func.func @transform_0(%arg0: i32) -> (i32, i32) {
    %c0_i32 = arith.constant 0 : i32
    %c0_i32_0 = arith.constant 0 : i32
    return %arg0, %c0_i32 : i32, i32
  }
  func.func @transform_1(%arg0: i32) -> (i32, i32) {
    %c0_i32 = arith.constant 0 : i32
    %c0_i32_0 = arith.constant 0 : i32
    %c0_i32_1 = arith.constant 0 : i32
    return %c0_i32, %c0_i32_0 : i32, i32
  }
  func.func @transform_2(%arg0: i32) -> (i32, i32) {
    %c0_i32 = arith.constant 0 : i32
    %c0_i32_0 = arith.constant 0 : i32
    %c0_i32_1 = arith.constant 0 : i32
    return %c0_i32, %c0_i32_0 : i32, i32
  }
  func.func @transform_3(%arg0: i32) -> (i32, i32) {
    %c0_i32 = arith.constant 0 : i32
    %c0_i32_0 = arith.constant 0 : i32
    %c0_i32_1 = arith.constant 0 : i32
    return %c0_i32, %c0_i32_0 : i32, i32
  }
  func.func @transform_4(%arg0: i32) -> (i32, i32) {
    %c0_i32 = arith.constant 0 : i32
    %c0_i32_0 = arith.constant 0 : i32
    %c0_i32_1 = arith.constant 0 : i32
    return %c0_i32, %c0_i32_0 : i32, i32
  }
  func.func @transform_5(%arg0: i32) -> (i32, i32) {
    %c0_i32 = arith.constant 0 : i32
    %c0_i32_0 = arith.constant 0 : i32
    %c0_i32_1 = arith.constant 0 : i32
    return %c0_i32, %c0_i32_0 : i32, i32
  }
  func.func @transform_6(%arg0: i32) -> (i32, i32) {
    %c0_i32 = arith.constant 0 : i32
    %c0_i32_0 = arith.constant 0 : i32
    %c0_i32_1 = arith.constant 0 : i32
    return %c0_i32, %c0_i32_0 : i32, i32
  }
  func.func @transform_7(%arg0: i32) -> (i32, i32) {
    %c0_i32 = arith.constant 0 : i32
    %c0_i32_0 = arith.constant 0 : i32
    return %arg0, %c0_i32 : i32, i32
  }
}

</mosaic_0001>

<llo_original>
// kernel: mlp_forward.1
$region0: #{mlp_forward.1}
  #allocation0 [shape = 'u32[]', space=smem, size = 0x4, offset = 0x4, fixed_abs, tag = 'smem constant byte address 0x4 - core index']
  #allocation1 [shape = 'u32[72,128]{1,0:T(1,128)}', space=vmem, size = 0x9000, scoped, tag = 'internal scratch']
  %s0 = inlined_call_operand.vmem [shape: f32[1024,32], index: 0, kind: input, shape index: {}]
  %s1 = inlined_call_operand.vmem [shape: bf16[32,32], index: 1, kind: input, shape index: {}]
  %s2 = inlined_call_operand.vmem [shape: f32[1,32], index: 2, kind: input, shape index: {}]
  %s3 = inlined_call_operand.vmem [shape: bf16[32,32], index: 3, kind: input, shape index: {}]
  %s4 = inlined_call_operand.vmem [shape: f32[1,32], index: 4, kind: input, shape index: {}]
  %s5 = inlined_call_operand.vmem [shape: bf16[32,16], index: 5, kind: input, shape index: {}]
  %s6 = inlined_call_operand.vmem [shape: f32[1,16], index: 6, kind: input, shape index: {}]
  %s7 = inlined_call_operand.vmem [shape: f32[1024,16], index: 7, kind: output, shape index: {}]
  %s8 = sld [smem:[#allocation0]]
  $region61: #{mlp_forward.1} parent=0
    _
  %s10 = ssub.s32 1, %s8
  %s11 = scalar_select 0, %s10, %s8
  loop: start=0, step=1, limit=4
  $region2: #{mlp_forward.1} parent=0 // loop_pre_header
    _
  $region3: #{mlp_forward.1} parent=0 // loop_header
    %s13 = sphi 0, %s17
    %p14 = scmp.ge.s32.totalorder %s13, 4
    %s23 = sphi 0, %s25
    %s26 = sphi 0, %s23
    %s27 = sphi 0, %s26
    %s43 = sphi 0, %s27
    %s47 = sphi 0, %s47
    %s49 = sphi 0, %s47
    %s50 = sphi 0, %s49
    %s64 = sphi 0, %s50
    %s68 = sphi 0, %s68
    %s70 = sphi 0, %s68
    %s71 = sphi 0, %s70
    %s85 = sphi 0, %s71
    %s89 = sphi 0, %s89
    %s91 = sphi 0, %s89
    %s92 = sphi 0, %s91
    %s106 = sphi 0, %s92
    %s110 = sphi 0, %s110
    %s112 = sphi 0, %s110
    %s113 = sphi 0, %s112
    %s127 = sphi 0, %s113
    %s131 = sphi 0, %s131
    %s133 = sphi 0, %s131
    %s134 = sphi 0, %s133
    %s148 = sphi 0, %s134
    %s152 = sphi 0, %s152
    %s154 = sphi 0, %s152
    %s155 = sphi 0, %s154
    %s169 = sphi 0, %s155
    %s175 = sphi 0, %s177
    %s178 = sphi 0, %s175
    %s179 = sphi 0, %s178
    %s195 = sphi 0, %s179
  $region4: #{mlp_forward.1} parent=0 // loop_header_branch
    %16 = sbr.rel (%p14) target = $region8
  $region5: #{mlp_forward.1} parent=0 // loop_body
    %s18 = ssub.s32 %s13, 1
    %s19 = ssub.s32 %s13, 2
    %s20 = sadd.s32 %s13, 1
    %s21 = ssub.s32 %s13, %s20
    %p22 = scmp.eq.s32.totalorder %s21, 0
    %s24 = sadd.s32 %s23, 1
    %s25 = scalar_select %p22, %s23, %s24
    %p28 = pneg %p22
    %p29 = scmp.eq.s32.totalorder %s13, 1
    %p30 = por %p28, %p29
    %p31 = scmp.ne.s32.totalorder %s23, %s26
    %p32 = scmp.eq.s32.totalorder %s13, 0
    %p33 = por %p31, %p32
    %p34 = scmp.ne.s32.totalorder %s23, %s26
    %p35 = scmp.eq.s32.totalorder %s18, 1
    %p36 = por %p34, %p35
    %p37 = scmp.ne.s32.totalorder %s26, %s27
    %p38 = scmp.eq.s32.totalorder %s18, 0
    %p39 = por %p37, %p38
    %p40 = scmp.ne.s32.totalorder %s26, %s27
    %p41 = scmp.eq.s32.totalorder %s19, 1
    %p42 = por %p40, %p41
    %p44 = scmp.ne.s32.totalorder %s27, %s43
    %p45 = scmp.eq.s32.totalorder %s19, 0
    %p46 = por %p44, %p45
    %s48 = sadd.s32 %s47, 1
    %p51 = scmp.eq.s32.totalorder %s13, 1
    %p52 = scmp.ne.s32.totalorder %s47, %s49
    %p53 = scmp.eq.s32.totalorder %s13, 0
    %p54 = por %p52, %p53
    %p55 = scmp.ne.s32.totalorder %s47, %s49
    %p56 = scmp.eq.s32.totalorder %s18, 1
    %p57 = por %p55, %p56
    %p58 = scmp.ne.s32.totalorder %s49, %s50
    %p59 = scmp.eq.s32.totalorder %s18, 0
    %p60 = por %p58, %p59
    %p61 = scmp.ne.s32.totalorder %s49, %s50
    %p62 = scmp.eq.s32.totalorder %s19, 1
    %p63 = por %p61, %p62
    %p65 = scmp.ne.s32.totalorder %s50, %s64
    %p66 = scmp.eq.s32.totalorder %s19, 0
    %p67 = por %p65, %p66
    %s69 = sadd.s32 %s68, 1
    %p72 = scmp.eq.s32.totalorder %s13, 1
    %p73 = scmp.ne.s32.totalorder %s68, %s70
    %p74 = scmp.eq.s32.totalorder %s13, 0
    %p75 = por %p73, %p74
    %p76 = scmp.ne.s32.totalorder %s68, %s70
    %p77 = scmp.eq.s32.totalorder %s18, 1
    %p78 = por %p76, %p77
    %p79 = scmp.ne.s32.totalorder %s70, %s71
    %p80 = scmp.eq.s32.totalorder %s18, 0
    %p81 = por %p79, %p80
    %p82 = scmp.ne.s32.totalorder %s70, %s71
    %p83 = scmp.eq.s32.totalorder %s19, 1
    %p84 = por %p82, %p83
    %p86 = scmp.ne.s32.totalorder %s71, %s85
    %p87 = scmp.eq.s32.totalorder %s19, 0
    %p88 = por %p86, %p87
    %s90 = sadd.s32 %s89, 1
    %p93 = scmp.eq.s32.totalorder %s13, 1
    %p94 = scmp.ne.s32.totalorder %s89, %s91
    %p95 = scmp.eq.s32.totalorder %s13, 0
    %p96 = por %p94, %p95
    %p97 = scmp.ne.s32.totalorder %s89, %s91
    %p98 = scmp.eq.s32.totalorder %s18, 1
    %p99 = por %p97, %p98
    %p100 = scmp.ne.s32.totalorder %s91, %s92
    %p101 = scmp.eq.s32.totalorder %s18, 0
    %p102 = por %p100, %p101
    %p103 = scmp.ne.s32.totalorder %s91, %s92
    %p104 = scmp.eq.s32.totalorder %s19, 1
    %p105 = por %p103, %p104
    %p107 = scmp.ne.s32.totalorder %s92, %s106
    %p108 = scmp.eq.s32.totalorder %s19, 0
    %p109 = por %p107, %p108
    %s111 = sadd.s32 %s110, 1
    %p114 = scmp.eq.s32.totalorder %s13, 1
    %p115 = scmp.ne.s32.totalorder %s110, %s112
    %p116 = scmp.eq.s32.totalorder %s13, 0
    %p117 = por %p115, %p116
    %p118 = scmp.ne.s32.totalorder %s110, %s112
    %p119 = scmp.eq.s32.totalorder %s18, 1
    %p120 = por %p118, %p119
    %p121 = scmp.ne.s32.totalorder %s112, %s113
    %p122 = scmp.eq.s32.totalorder %s18, 0
    %p123 = por %p121, %p122
    %p124 = scmp.ne.s32.totalorder %s112, %s113
    %p125 = scmp.eq.s32.totalorder %s19, 1
    %p126 = por %p124, %p125
    %p128 = scmp.ne.s32.totalorder %s113, %s127
    %p129 = scmp.eq.s32.totalorder %s19, 0
    %p130 = por %p128, %p129
    %s132 = sadd.s32 %s131, 1
    %p135 = scmp.eq.s32.totalorder %s13, 1
    %p136 = scmp.ne.s32.totalorder %s131, %s133
    %p137 = scmp.eq.s32.totalorder %s13, 0
    %p138 = por %p136, %p137
    %p139 = scmp.ne.s32.totalorder %s131, %s133
    %p140 = scmp.eq.s32.totalorder %s18, 1
    %p141 = por %p139, %p140
    %p142 = scmp.ne.s32.totalorder %s133, %s134
    %p143 = scmp.eq.s32.totalorder %s18, 0
    %p144 = por %p142, %p143
    %p145 = scmp.ne.s32.totalorder %s133, %s134
    %p146 = scmp.eq.s32.totalorder %s19, 1
    %p147 = por %p145, %p146
    %p149 = scmp.ne.s32.totalorder %s134, %s148
    %p150 = scmp.eq.s32.totalorder %s19, 0
    %p151 = por %p149, %p150
    %s153 = sadd.s32 %s152, 1
    %p156 = scmp.eq.s32.totalorder %s13, 1
    %p157 = scmp.ne.s32.totalorder %s152, %s154
    %p158 = scmp.eq.s32.totalorder %s13, 0
    %p159 = por %p157, %p158
    %p160 = scmp.ne.s32.totalorder %s152, %s154
    %p161 = scmp.eq.s32.totalorder %s18, 1
    %p162 = por %p160, %p161
    %p163 = scmp.ne.s32.totalorder %s154, %s155
    %p164 = scmp.eq.s32.totalorder %s18, 0
    %p165 = por %p163, %p164
    %p166 = scmp.ne.s32.totalorder %s154, %s155
    %p167 = scmp.eq.s32.totalorder %s19, 1
    %p168 = por %p166, %p167
    %p170 = scmp.ne.s32.totalorder %s155, %s169
    %p171 = scmp.eq.s32.totalorder %s19, 0
    %p172 = por %p170, %p171
    %s173 = ssub.s32 %s13, %s20
    %p174 = scmp.eq.s32.totalorder %s173, 0
    %s176 = sadd.s32 %s175, 1
    %s177 = scalar_select %p174, %s175, %s176
    %p180 = pneg %p174
    %p181 = scmp.eq.s32.totalorder %s13, 1
    %p182 = por %p180, %p181
    %p183 = scmp.ne.s32.totalorder %s175, %s178
    %p184 = scmp.eq.s32.totalorder %s13, 0
    %p185 = por %p183, %p184
    %p186 = scmp.ne.s32.totalorder %s175, %s178
    %p187 = scmp.eq.s32.totalorder %s18, 1
    %p188 = por %p186, %p187
    %p189 = scmp.ne.s32.totalorder %s178, %s179
    %p190 = scmp.eq.s32.totalorder %s18, 0
    %p191 = por %p189, %p190
    %p192 = scmp.ne.s32.totalorder %s178, %s179
    %p193 = scmp.eq.s32.totalorder %s19, 1
    %p194 = por %p192, %p193
    %p196 = scmp.ne.s32.totalorder %s179, %s195
    %p197 = scmp.eq.s32.totalorder %s19, 0
    %p198 = por %p196, %p197
    %p199 = scmp.le.s32.totalorder 1, %s13
    %p200 = scmp.lt.s32.totalorder %s13, 3
    %p201 = pnand %p199, %p200
    %p202 = pneg %p201
    // Predicated region
    $region9: #{mlp_forward.1} parent=5 // pred_check
      _
    $region10: #{mlp_forward.1} parent=5 // pred_check_branch
      %204 = sbr.rel (%p201) target = $region12
    $region11: #{mlp_forward.1} parent=5 // pred_region
      %s205 = ssub.s32 %s13, 1
      // Predicated region
      $region13: #{mlp_forward.1} parent=11 // pred_check
        %p206 = pneg %p60
      $region14: #{mlp_forward.1} parent=11 // pred_check_branch
        %208 = sbr.rel (%p206) target = $region16
      $region15: #{mlp_forward.1} parent=11 // pred_region
        _
      $region16: #{mlp_forward.1} parent=11 // pred_fallthru
        _
      // Predicated region
      $region17: #{mlp_forward.1} parent=11 // pred_check
        %p209 = pneg %p81
      $region18: #{mlp_forward.1} parent=11 // pred_check_branch
        %211 = sbr.rel (%p209) target = $region20
      $region19: #{mlp_forward.1} parent=11 // pred_region
        _
      $region20: #{mlp_forward.1} parent=11 // pred_fallthru
        _
      // Predicated region
      $region21: #{mlp_forward.1} parent=11 // pred_check
        %p212 = pneg %p102
      $region22: #{mlp_forward.1} parent=11 // pred_check_branch
        %214 = sbr.rel (%p212) target = $region24
      $region23: #{mlp_forward.1} parent=11 // pred_region
        _
      $region24: #{mlp_forward.1} parent=11 // pred_fallthru
        _
      // Predicated region
      $region25: #{mlp_forward.1} parent=11 // pred_check
        %p215 = pneg %p123
      $region26: #{mlp_forward.1} parent=11 // pred_check_branch
        %217 = sbr.rel (%p215) target = $region28
      $region27: #{mlp_forward.1} parent=11 // pred_region
        _
      $region28: #{mlp_forward.1} parent=11 // pred_fallthru
        _
      // Predicated region
      $region29: #{mlp_forward.1} parent=11 // pred_check
        %p218 = pneg %p144
      $region30: #{mlp_forward.1} parent=11 // pred_check_branch
        %220 = sbr.rel (%p218) target = $region32
      $region31: #{mlp_forward.1} parent=11 // pred_region
        _
      $region32: #{mlp_forward.1} parent=11 // pred_fallthru
        _
      // Predicated region
      $region33: #{mlp_forward.1} parent=11 // pred_check
        %p221 = pneg %p165
      $region34: #{mlp_forward.1} parent=11 // pred_check_branch
        %223 = sbr.rel (%p221) target = $region36
      $region35: #{mlp_forward.1} parent=11 // pred_region
        _
      $region36: #{mlp_forward.1} parent=11 // pred_fallthru
        _
    $region12: #{mlp_forward.1} parent=5 // pred_fallthru
      _
    %p224 = scmp.lt.s32.totalorder %s13, 2
    // Predicated region
    $region37: #{mlp_forward.1} parent=5 // pred_check
      %p225 = pneg %p224
    $region38: #{mlp_forward.1} parent=5 // pred_check_branch
      %227 = sbr.rel (%p225) target = $region40
    $region39: #{mlp_forward.1} parent=5 // pred_region
      // Predicated region
      $region41: #{mlp_forward.1} parent=39 // pred_check
        %p228 = pneg %p33
      $region42: #{mlp_forward.1} parent=39 // pred_check_branch
        %230 = sbr.rel (%p228) target = $region44
      $region43: #{mlp_forward.1} parent=39 // pred_region
        %s231 = smul.u32 64, %s13
        %p232 = scmp.lt.s32.totalorder %s231, 127
        %s233 = scalar_select %p232, %s231, 127
        %s234 = smul.addr %s233, 8
        %s235 = scalar_lea.vmem %s0, %s234
        %s236 = smul.u32 64, %s13
      $region44: #{mlp_forward.1} parent=39 // pred_fallthru
        _
    $region40: #{mlp_forward.1} parent=5 // pred_fallthru
      _
    %p237 = scmp.le.s32.totalorder 1, %s13
    %p238 = scmp.lt.s32.totalorder %s13, 3
    %p239 = pnand %p237, %p238
    %p240 = pneg %p239
    // Predicated region
    $region45: #{mlp_forward.1} parent=5 // pred_check
      _
    $region46: #{mlp_forward.1} parent=5 // pred_check_branch
      %242 = sbr.rel (%p239) target = $region48
    $region47: #{mlp_forward.1} parent=5 // pred_region
      %s243 = ssub.s32 %s13, 1
      %s244 = smul.u32 64, %s18
      %p245 = scmp.lt.s32.totalorder %s244, 127
      %s246 = scalar_select %p245, %s244, 127
      %s247 = smul.addr %s246, 8
      %s248 = scalar_lea.vmem %s0, %s247
      %p249 = pneg %p39
      %p250 = pneg %p36
      %p251 = pneg %p60
      %p252 = pneg %p57
      %p253 = pneg %p81
      %p254 = pneg %p78
      %p255 = pneg %p102
      %p256 = pneg %p99
      %p257 = pneg %p123
      %p258 = pneg %p120
      %p259 = pneg %p144
      %p260 = pneg %p141
      %p261 = pneg %p165
      %p262 = pneg %p162
      %p263 = pneg %p191
      %p264 = pneg %p188
      %s265 = smul.u32 64, %s18
      %p266 = scmp.lt.s32.totalorder %s265, 127
      %s267 = scalar_select %p266, %s265, 127
      %s268 = smul.addr %s267, 8
      %s269 = scalar_lea.vmem %s7, %s268
      %s270 = smul.u32 64, %s18
      %p271 = scmp.lt.s32.totalorder %s270, 127
      %s272 = scalar_select %p271, %s270, 127
      %s273 = smul.addr %s272, 8
      %s274 = scalar_lea.vmem %s0, %s273
      %s275 = smul.u32 64, %s18
      %s276 = smul.u32 64, %s18
      %p277 = scmp.lt.s32.totalorder %s276, 127
      %s278 = scalar_select %p277, %s276, 127
      %s279 = smul.addr %s278, 8
      %s280 = scalar_lea.vmem %s7, %s279
      %s281 = smul.u32 64, %s18
      %v283 = vld [vmem:[%s274] sm:$0xff]
      %v284 = vld [vmem:[%s274 + $0x8] sm:$0xff]
      %v285 = vld [vmem:[%s274 + $0x10] sm:$0xff]
      %v286 = vld [vmem:[%s274 + $0x18] sm:$0xff]
      %v287 = vld [vmem:[%s274 + $0x20] sm:$0xff]
      %v288 = vld [vmem:[%s274 + $0x28] sm:$0xff]
      %v289 = vld [vmem:[%s274 + $0x30] sm:$0xff]
      %v290 = vld [vmem:[%s274 + $0x38] sm:$0xff]
      %v291 = vld [vmem:[%s274 + $0x40] sm:$0xff]
      %v292 = vld [vmem:[%s274 + $0x48] sm:$0xff]
      %v293 = vld [vmem:[%s274 + $0x50] sm:$0xff]
      %v294 = vld [vmem:[%s274 + $0x58] sm:$0xff]
      %v295 = vld [vmem:[%s274 + $0x60] sm:$0xff]
      %v296 = vld [vmem:[%s274 + $0x68] sm:$0xff]
      %v297 = vld [vmem:[%s274 + $0x70] sm:$0xff]
      %v298 = vld [vmem:[%s274 + $0x78] sm:$0xff]
      %v299 = vld [vmem:[%s274 + $0x80] sm:$0xff]
      %v300 = vld [vmem:[%s274 + $0x88] sm:$0xff]
      %v301 = vld [vmem:[%s274 + $0x90] sm:$0xff]
      %v302 = vld [vmem:[%s274 + $0x98] sm:$0xff]
      %v303 = vld [vmem:[%s274 + $0xa0] sm:$0xff]
      %v304 = vld [vmem:[%s274 + $0xa8] sm:$0xff]
      %v305 = vld [vmem:[%s274 + $0xb0] sm:$0xff]
      %v306 = vld [vmem:[%s274 + $0xb8] sm:$0xff]
      %v307 = vld [vmem:[%s274 + $0xc0] sm:$0xff]
      %v308 = vld [vmem:[%s274 + $0xc8] sm:$0xff]
      %v309 = vld [vmem:[%s274 + $0xd0] sm:$0xff]
      %v310 = vld [vmem:[%s274 + $0xd8] sm:$0xff]
      %v311 = vld [vmem:[%s274 + $0xe0] sm:$0xff]
      %v312 = vld [vmem:[%s274 + $0xe8] sm:$0xff]
      %v313 = vld [vmem:[%s274 + $0xf0] sm:$0xff]
      %v314 = vld [vmem:[%s274 + $0xf8] sm:$0xff]
      %v315 = vld [vmem:[%s274 + $0x100] sm:$0xff]
      %v316 = vld [vmem:[%s274 + $0x108] sm:$0xff]
      %v317 = vld [vmem:[%s274 + $0x110] sm:$0xff]
      %v318 = vld [vmem:[%s274 + $0x118] sm:$0xff]
      %v319 = vld [vmem:[%s274 + $0x120] sm:$0xff]
      %v320 = vld [vmem:[%s274 + $0x128] sm:$0xff]
      %v321 = vld [vmem:[%s274 + $0x130] sm:$0xff]
      %v322 = vld [vmem:[%s274 + $0x138] sm:$0xff]
      %v323 = vld [vmem:[%s274 + $0x140] sm:$0xff]
      %v324 = vld [vmem:[%s274 + $0x148] sm:$0xff]
      %v325 = vld [vmem:[%s274 + $0x150] sm:$0xff]
      %v326 = vld [vmem:[%s274 + $0x158] sm:$0xff]
      %v327 = vld [vmem:[%s274 + $0x160] sm:$0xff]
      %v328 = vld [vmem:[%s274 + $0x168] sm:$0xff]
      %v329 = vld [vmem:[%s274 + $0x170] sm:$0xff]
      %v330 = vld [vmem:[%s274 + $0x178] sm:$0xff]
      %v331 = vld [vmem:[%s274 + $0x180] sm:$0xff]
      %v332 = vld [vmem:[%s274 + $0x188] sm:$0xff]
      %v333 = vld [vmem:[%s274 + $0x190] sm:$0xff]
      %v334 = vld [vmem:[%s274 + $0x198] sm:$0xff]
      %v335 = vld [vmem:[%s274 + $0x1a0] sm:$0xff]
      %v336 = vld [vmem:[%s274 + $0x1a8] sm:$0xff]
      %v337 = vld [vmem:[%s274 + $0x1b0] sm:$0xff]
      %v338 = vld [vmem:[%s274 + $0x1b8] sm:$0xff]
      %v339 = vld [vmem:[%s274 + $0x1c0] sm:$0xff]
      %v340 = vld [vmem:[%s274 + $0x1c8] sm:$0xff]
      %v341 = vld [vmem:[%s274 + $0x1d0] sm:$0xff]
      %v342 = vld [vmem:[%s274 + $0x1d8] sm:$0xff]
      %v343 = vld [vmem:[%s274 + $0x1e0] sm:$0xff]
      %v344 = vld [vmem:[%s274 + $0x1e8] sm:$0xff]
      %v345 = vld [vmem:[%s274 + $0x1f0] sm:$0xff]
      %v346 = vld [vmem:[%s274 + $0x1f8] sm:$0xff]
      %v347 = vpack.c.bf16 %v284, %v283
      %v348 = vpack.c.bf16 %v286, %v285
      %v349 = vpack.c.bf16 %v288, %v287
      %v350 = vpack.c.bf16 %v290, %v289
      %v351 = vpack.c.bf16 %v292, %v291
      %v352 = vpack.c.bf16 %v294, %v293
      %v353 = vpack.c.bf16 %v296, %v295
      %v354 = vpack.c.bf16 %v298, %v297
      %v355 = vpack.c.bf16 %v300, %v299
      %v356 = vpack.c.bf16 %v302, %v301
      %v357 = vpack.c.bf16 %v304, %v303
      %v358 = vpack.c.bf16 %v306, %v305
      %v359 = vpack.c.bf16 %v308, %v307
      %v360 = vpack.c.bf16 %v310, %v309
      %v361 = vpack.c.bf16 %v312, %v311
      %v362 = vpack.c.bf16 %v314, %v313
      %v363 = vpack.c.bf16 %v316, %v315
      %v364 = vpack.c.bf16 %v318, %v317
      %v365 = vpack.c.bf16 %v320, %v319
      %v366 = vpack.c.bf16 %v322, %v321
      %v367 = vpack.c.bf16 %v324, %v323
      %v368 = vpack.c.bf16 %v326, %v325
      %v369 = vpack.c.bf16 %v328, %v327
      %v370 = vpack.c.bf16 %v330, %v329
      %v371 = vpack.c.bf16 %v332, %v331
      %v372 = vpack.c.bf16 %v334, %v333
      %v373 = vpack.c.bf16 %v336, %v335
      %v374 = vpack.c.bf16 %v338, %v337
      %v375 = vpack.c.bf16 %v340, %v339
      %v376 = vpack.c.bf16 %v342, %v341
      %v377 = vpack.c.bf16 %v344, %v343
      %v378 = vpack.c.bf16 %v346, %v345
      %v379 = vld [vmem:[%s1] sm:$0xf]
      %v380 = vld [vmem:[%s1 + $0x4] sm:$0xf]
      %v381 = vld [vmem:[%s1 + $0x8] sm:$0xf]
      %v382 = vld [vmem:[%s1 + $0xc] sm:$0xf]
      %v383 = vld [vmem:[%s2] sm:$0x1]
      %v385 = vperm.slane %v383, 0
      %v391 = vunpack.c.l.b16 %v379
      %v392 = vunpack.c.l.b16 %v380
      %v393 = vunpack.c.l.b16 %v381
      %v394 = vunpack.c.l.b16 %v382
      %v395 = vpack.c.b16 %v392, %v391
      %v396 = vpack.c.b16 %v394, %v393
      %vm399 = vcmask 261120
      %v401 = vsel %vm399, %v347, 0
      %v404 = vsel %vm399, %v348, 0
      %v407 = vsel %vm399, %v349, 0
      %v410 = vsel %vm399, %v350, 0
      %v413 = vsel %vm399, %v351, 0
      %v416 = vsel %vm399, %v352, 0
      %v419 = vsel %vm399, %v353, 0
      %v422 = vsel %vm399, %v354, 0
      %v425 = vsel %vm399, %v355, 0
      %v428 = vsel %vm399, %v356, 0
      %v431 = vsel %vm399, %v357, 0
      %v434 = vsel %vm399, %v358, 0
      %v437 = vsel %vm399, %v359, 0
      %v440 = vsel %vm399, %v360, 0
      %v443 = vsel %vm399, %v361, 0
      %v446 = vsel %vm399, %v362, 0
      %v449 = vsel %vm399, %v363, 0
      %v452 = vsel %vm399, %v364, 0
      %v455 = vsel %vm399, %v365, 0
      %v458 = vsel %vm399, %v366, 0
      %v461 = vsel %vm399, %v367, 0
      %v464 = vsel %vm399, %v368, 0
      %v467 = vsel %vm399, %v369, 0
      %v470 = vsel %vm399, %v370, 0
      %v473 = vsel %vm399, %v371, 0
      %v476 = vsel %vm399, %v372, 0
      %v479 = vsel %vm399, %v373, 0
      %v482 = vsel %vm399, %v374, 0
      %v485 = vsel %vm399, %v375, 0
      %v488 = vsel %vm399, %v376, 0
      %v491 = vsel %vm399, %v377, 0
      %v494 = vsel %vm399, %v378, 0
      %496 = vmatpush.bf16.msra.mxu0 0
      %497 = vmatpush.bf16.msra.mxu0 0
      %498 = vmatpush.bf16.msra.mxu0 0
      %499 = vmatpush.bf16.msra.mxu0 0
      %500 = vmatpush.bf16.msra.mxu0 0
      %501 = vmatpush.bf16.msra.mxu0 0
      %502 = vmatpush.bf16.msra.mxu0 %v396
      %503 = vmatpush.bf16.msra.mxu0 %v395
      %504 = vmatmul.bf16.gmra.mxu0 %v401
      %v505 = vpop.f32.mrf.mxu0
      %v506 = vadd.f32 %v385, %v505
      %v507 = vpop.f32.mrf.mxu0
      %v508 = vadd.f32 %v385, %v507
      %509 = vmatmul.bf16.gmra.mxu0 %v404
      %v510 = vpop.f32.mrf.mxu0
      %v511 = vadd.f32 %v385, %v510
      %v512 = vpop.f32.mrf.mxu0
      %v513 = vadd.f32 %v385, %v512
      %514 = vmatmul.bf16.gmra.mxu0 %v407
      %v515 = vpop.f32.mrf.mxu0
      %v516 = vadd.f32 %v385, %v515
      %v517 = vpop.f32.mrf.mxu0
      %v518 = vadd.f32 %v385, %v517
      %519 = vmatmul.bf16.gmra.mxu0 %v410
      %v520 = vpop.f32.mrf.mxu0
      %v521 = vadd.f32 %v385, %v520
      %v522 = vpop.f32.mrf.mxu0
      %v523 = vadd.f32 %v385, %v522
      %524 = vmatmul.bf16.gmra.mxu0 %v413
      %v525 = vpop.f32.mrf.mxu0
      %v526 = vadd.f32 %v385, %v525
      %v527 = vpop.f32.mrf.mxu0
      %v528 = vadd.f32 %v385, %v527
      %529 = vmatmul.bf16.gmra.mxu0 %v416
      %v530 = vpop.f32.mrf.mxu0
      %v531 = vadd.f32 %v385, %v530
      %v532 = vpop.f32.mrf.mxu0
      %v533 = vadd.f32 %v385, %v532
      %534 = vmatmul.bf16.gmra.mxu0 %v419
      %v535 = vpop.f32.mrf.mxu0
      %v536 = vadd.f32 %v385, %v535
      %v537 = vpop.f32.mrf.mxu0
      %v538 = vadd.f32 %v385, %v537
      %539 = vmatmul.bf16.gmra.mxu0 %v422
      %v540 = vpop.f32.mrf.mxu0
      %v541 = vadd.f32 %v385, %v540
      %v542 = vpop.f32.mrf.mxu0
      %v543 = vadd.f32 %v385, %v542
      %544 = vmatmul.bf16.gmra.mxu0 %v425
      %v545 = vpop.f32.mrf.mxu0
      %v546 = vadd.f32 %v385, %v545
      %v547 = vpop.f32.mrf.mxu0
      %v548 = vadd.f32 %v385, %v547
      %549 = vmatmul.bf16.gmra.mxu0 %v428
      %v550 = vpop.f32.mrf.mxu0
      %v551 = vadd.f32 %v385, %v550
      %v552 = vpop.f32.mrf.mxu0
      %v553 = vadd.f32 %v385, %v552
      %554 = vmatmul.bf16.gmra.mxu0 %v431
      %v555 = vpop.f32.mrf.mxu0
      %v556 = vadd.f32 %v385, %v555
      %v557 = vpop.f32.mrf.mxu0
      %v558 = vadd.f32 %v385, %v557
      %559 = vmatmul.bf16.gmra.mxu0 %v434
      %v560 = vpop.f32.mrf.mxu0
      %v561 = vadd.f32 %v385, %v560
      %v562 = vpop.f32.mrf.mxu0
      %v563 = vadd.f32 %v385, %v562
      %564 = vmatmul.bf16.gmra.mxu0 %v437
      %v565 = vpop.f32.mrf.mxu0
      %v566 = vadd.f32 %v385, %v565
      %v567 = vpop.f32.mrf.mxu0
      %v568 = vadd.f32 %v385, %v567
      %569 = vmatmul.bf16.gmra.mxu0 %v440
      %v570 = vpop.f32.mrf.mxu0
      %v571 = vadd.f32 %v385, %v570
      %v572 = vpop.f32.mrf.mxu0
      %v573 = vadd.f32 %v385, %v572
      %574 = vmatmul.bf16.gmra.mxu0 %v443
      %v575 = vpop.f32.mrf.mxu0
      %v576 = vadd.f32 %v385, %v575
      %v577 = vpop.f32.mrf.mxu0
      %v578 = vadd.f32 %v385, %v577
      %579 = vmatmul.bf16.gmra.mxu0 %v446
      %v580 = vpop.f32.mrf.mxu0
      %v581 = vadd.f32 %v385, %v580
      %v582 = vpop.f32.mrf.mxu0
      %v583 = vadd.f32 %v385, %v582
      %584 = vmatmul.bf16.gmra.mxu0 %v449
      %v585 = vpop.f32.mrf.mxu0
      %v586 = vadd.f32 %v385, %v585
      %v587 = vpop.f32.mrf.mxu0
      %v588 = vadd.f32 %v385, %v587
      %589 = vmatmul.bf16.gmra.mxu0 %v452
      %v590 = vpop.f32.mrf.mxu0
      %v591 = vadd.f32 %v385, %v590
      %v592 = vpop.f32.mrf.mxu0
      %v593 = vadd.f32 %v385, %v592
      %594 = vmatmul.bf16.gmra.mxu0 %v455
      %v595 = vpop.f32.mrf.mxu0
      %v596 = vadd.f32 %v385, %v595
      %v597 = vpop.f32.mrf.mxu0
      %v598 = vadd.f32 %v385, %v597
      %599 = vmatmul.bf16.gmra.mxu0 %v458
      %v600 = vpop.f32.mrf.mxu0
      %v601 = vadd.f32 %v385, %v600
      %v602 = vpop.f32.mrf.mxu0
      %v603 = vadd.f32 %v385, %v602
      %604 = vmatmul.bf16.gmra.mxu0 %v461
      %v605 = vpop.f32.mrf.mxu0
      %v606 = vadd.f32 %v385, %v605
      %v607 = vpop.f32.mrf.mxu0
      %v608 = vadd.f32 %v385, %v607
      %609 = vmatmul.bf16.gmra.mxu0 %v464
      %v610 = vpop.f32.mrf.mxu0
      %v611 = vadd.f32 %v385, %v610
      %v612 = vpop.f32.mrf.mxu0
      %v613 = vadd.f32 %v385, %v612
      %614 = vmatmul.bf16.gmra.mxu0 %v467
      %v615 = vpop.f32.mrf.mxu0
      %v616 = vadd.f32 %v385, %v615
      %v617 = vpop.f32.mrf.mxu0
      %v618 = vadd.f32 %v385, %v617
      %619 = vmatmul.bf16.gmra.mxu0 %v470
      %v620 = vpop.f32.mrf.mxu0
      %v621 = vadd.f32 %v385, %v620
      %v622 = vpop.f32.mrf.mxu0
      %v623 = vadd.f32 %v385, %v622
      %624 = vmatmul.bf16.gmra.mxu0 %v473
      %v625 = vpop.f32.mrf.mxu0
      %v626 = vadd.f32 %v385, %v625
      %v627 = vpop.f32.mrf.mxu0
      %v628 = vadd.f32 %v385, %v627
      %629 = vmatmul.bf16.gmra.mxu0 %v476
      %v630 = vpop.f32.mrf.mxu0
      %v631 = vadd.f32 %v385, %v630
      %v632 = vpop.f32.mrf.mxu0
      %v633 = vadd.f32 %v385, %v632
      %634 = vmatmul.bf16.gmra.mxu0 %v479
      %v635 = vpop.f32.mrf.mxu0
      %v636 = vadd.f32 %v385, %v635
      %v637 = vpop.f32.mrf.mxu0
      %v638 = vadd.f32 %v385, %v637
      %639 = vmatmul.bf16.gmra.mxu0 %v482
      %v640 = vpop.f32.mrf.mxu0
      %v641 = vadd.f32 %v385, %v640
      %v642 = vpop.f32.mrf.mxu0
      %v643 = vadd.f32 %v385, %v642
      %644 = vmatmul.bf16.gmra.mxu0 %v485
      %v645 = vpop.f32.mrf.mxu0
      %v646 = vadd.f32 %v385, %v645
      %v647 = vpop.f32.mrf.mxu0
      %v648 = vadd.f32 %v385, %v647
      %649 = vmatmul.bf16.gmra.mxu0 %v488
      %v650 = vpop.f32.mrf.mxu0
      %v651 = vadd.f32 %v385, %v650
      %v652 = vpop.f32.mrf.mxu0
      %v653 = vadd.f32 %v385, %v652
      %654 = vmatmul.bf16.gmra.mxu0 %v491
      %v655 = vpop.f32.mrf.mxu0
      %v656 = vadd.f32 %v385, %v655
      %v657 = vpop.f32.mrf.mxu0
      %v658 = vadd.f32 %v385, %v657
      %659 = vmatmul.bf16.gmra.mxu0 %v494
      %v660 = vpop.f32.mrf.mxu0
      %v661 = vadd.f32 %v385, %v660
      %v662 = vpop.f32.mrf.mxu0
      %v663 = vadd.f32 %v385, %v662
      %664 = vdwg.mxu0
      %v665 = vmax.f32 %v506, 0.0
      %v666 = vmax.f32 %v508, 0.0
      %v667 = vmax.f32 %v511, 0.0
      %v668 = vmax.f32 %v513, 0.0
      %v669 = vmax.f32 %v516, 0.0
      %v670 = vmax.f32 %v518, 0.0
      %v671 = vmax.f32 %v521, 0.0
      %v672 = vmax.f32 %v523, 0.0
      %v673 = vmax.f32 %v526, 0.0
      %v674 = vmax.f32 %v528, 0.0
      %v675 = vmax.f32 %v531, 0.0
      %v676 = vmax.f32 %v533, 0.0
      %v677 = vmax.f32 %v536, 0.0
      %v678 = vmax.f32 %v538, 0.0
      %v679 = vmax.f32 %v541, 0.0
      %v680 = vmax.f32 %v543, 0.0
      %v681 = vmax.f32 %v546, 0.0
      %v682 = vmax.f32 %v548, 0.0
      %v683 = vmax.f32 %v551, 0.0
      %v684 = vmax.f32 %v553, 0.0
      %v685 = vmax.f32 %v556, 0.0
      %v686 = vmax.f32 %v558, 0.0
      %v687 = vmax.f32 %v561, 0.0
      %v688 = vmax.f32 %v563, 0.0
      %v689 = vmax.f32 %v566, 0.0
      %v690 = vmax.f32 %v568, 0.0
      %v691 = vmax.f32 %v571, 0.0
      %v692 = vmax.f32 %v573, 0.0
      %v693 = vmax.f32 %v576, 0.0
      %v694 = vmax.f32 %v578, 0.0
      %v695 = vmax.f32 %v581, 0.0
      %v696 = vmax.f32 %v583, 0.0
      %v697 = vmax.f32 %v586, 0.0
      %v698 = vmax.f32 %v588, 0.0
      %v699 = vmax.f32 %v591, 0.0
      %v700 = vmax.f32 %v593, 0.0
      %v701 = vmax.f32 %v596, 0.0
      %v702 = vmax.f32 %v598, 0.0
      %v703 = vmax.f32 %v601, 0.0
      %v704 = vmax.f32 %v603, 0.0
      %v705 = vmax.f32 %v606, 0.0
      %v706 = vmax.f32 %v608, 0.0
      %v707 = vmax.f32 %v611, 0.0
      %v708 = vmax.f32 %v613, 0.0
      %v709 = vmax.f32 %v616, 0.0
      %v710 = vmax.f32 %v618, 0.0
      %v711 = vmax.f32 %v621, 0.0
      %v712 = vmax.f32 %v623, 0.0
      %v713 = vmax.f32 %v626, 0.0
      %v714 = vmax.f32 %v628, 0.0
      %v715 = vmax.f32 %v631, 0.0
      %v716 = vmax.f32 %v633, 0.0
      %v717 = vmax.f32 %v636, 0.0
      %v718 = vmax.f32 %v638, 0.0
      %v719 = vmax.f32 %v641, 0.0
      %v720 = vmax.f32 %v643, 0.0
      %v721 = vmax.f32 %v646, 0.0
      %v722 = vmax.f32 %v648, 0.0
      %v723 = vmax.f32 %v651, 0.0
      %v724 = vmax.f32 %v653, 0.0
      %v725 = vmax.f32 %v656, 0.0
      %v726 = vmax.f32 %v658, 0.0
      %v727 = vmax.f32 %v661, 0.0
      %v728 = vmax.f32 %v663, 0.0
      %v729 = vpack.c.bf16 %v666, %v665
      %v730 = vpack.c.bf16 %v668, %v667
      %v731 = vpack.c.bf16 %v670, %v669
      %v732 = vpack.c.bf16 %v672, %v671
      %v733 = vpack.c.bf16 %v674, %v673
      %v734 = vpack.c.bf16 %v676, %v675
      %v735 = vpack.c.bf16 %v678, %v677
      %v736 = vpack.c.bf16 %v680, %v679
      %v737 = vpack.c.bf16 %v682, %v681
      %v738 = vpack.c.bf16 %v684, %v683
      %v739 = vpack.c.bf16 %v686, %v685
      %v740 = vpack.c.bf16 %v688, %v687
      %v741 = vpack.c.bf16 %v690, %v689
      %v742 = vpack.c.bf16 %v692, %v691
      %v743 = vpack.c.bf16 %v694, %v693
      %v744 = vpack.c.bf16 %v696, %v695
      %v745 = vpack.c.bf16 %v698, %v697
      %v746 = vpack.c.bf16 %v700, %v699
      %v747 = vpack.c.bf16 %v702, %v701
      %v748 = vpack.c.bf16 %v704, %v703
      %v749 = vpack.c.bf16 %v706, %v705
      %v750 = vpack.c.bf16 %v708, %v707
      %v751 = vpack.c.bf16 %v710, %v709
      %v752 = vpack.c.bf16 %v712, %v711
      %v753 = vpack.c.bf16 %v714, %v713
      %v754 = vpack.c.bf16 %v716, %v715
      %v755 = vpack.c.bf16 %v718, %v717
      %v756 = vpack.c.bf16 %v720, %v719
      %v757 = vpack.c.bf16 %v722, %v721
      %v758 = vpack.c.bf16 %v724, %v723
      %v759 = vpack.c.bf16 %v726, %v725
      %v760 = vpack.c.bf16 %v728, %v727
      %v761 = vld [vmem:[%s3] sm:$0xf]
      %v762 = vld [vmem:[%s3 + $0x4] sm:$0xf]
      %v763 = vld [vmem:[%s3 + $0x8] sm:$0xf]
      %v764 = vld [vmem:[%s3 + $0xc] sm:$0xf]
      %v765 = vld [vmem:[%s4] sm:$0x1]
      %v767 = vperm.slane %v765, 0
      %v773 = vunpack.c.l.b16 %v761
      %v774 = vunpack.c.l.b16 %v762
      %v775 = vunpack.c.l.b16 %v763
      %v776 = vunpack.c.l.b16 %v764
      %v777 = vpack.c.b16 %v774, %v773
      %v778 = vpack.c.b16 %v776, %v775
      %v782 = vsel %vm399, %v729, 0
      %v785 = vsel %vm399, %v730, 0
      %v788 = vsel %vm399, %v731, 0
      %v791 = vsel %vm399, %v732, 0
      %v794 = vsel %vm399, %v733, 0
      %v797 = vsel %vm399, %v734, 0
      %v800 = vsel %vm399, %v735, 0
      %v803 = vsel %vm399, %v736, 0
      %v806 = vsel %vm399, %v737, 0
      %v809 = vsel %vm399, %v738, 0
      %v812 = vsel %vm399, %v739, 0
      %v815 = vsel %vm399, %v740, 0
      %v818 = vsel %vm399, %v741, 0
      %v821 = vsel %vm399, %v742, 0
      %v824 = vsel %vm399, %v743, 0
      %v827 = vsel %vm399, %v744, 0
      %v830 = vsel %vm399, %v745, 0
      %v833 = vsel %vm399, %v746, 0
      %v836 = vsel %vm399, %v747, 0
      %v839 = vsel %vm399, %v748, 0
      %v842 = vsel %vm399, %v749, 0
      %v845 = vsel %vm399, %v750, 0
      %v848 = vsel %vm399, %v751, 0
      %v851 = vsel %vm399, %v752, 0
      %v854 = vsel %vm399, %v753, 0
      %v857 = vsel %vm399, %v754, 0
      %v860 = vsel %vm399, %v755, 0
      %v863 = vsel %vm399, %v756, 0
      %v866 = vsel %vm399, %v757, 0
      %v869 = vsel %vm399, %v758, 0
      %v872 = vsel %vm399, %v759, 0
      %v875 = vsel %vm399, %v760, 0
      %877 = vmatpush.bf16.msra.mxu0 0
      %878 = vmatpush.bf16.msra.mxu0 0
      %879 = vmatpush.bf16.msra.mxu0 0
      %880 = vmatpush.bf16.msra.mxu0 0
      %881 = vmatpush.bf16.msra.mxu0 0
      %882 = vmatpush.bf16.msra.mxu0 0
      %883 = vmatpush.bf16.msra.mxu0 %v778
      %884 = vmatpush.bf16.msra.mxu0 %v777
      %885 = vmatmul.bf16.gmra.mxu0 %v782
      %v886 = vpop.f32.mrf.mxu0
      %v887 = vadd.f32 %v767, %v886
      %v888 = vpop.f32.mrf.mxu0
      %v889 = vadd.f32 %v767, %v888
      %890 = vmatmul.bf16.gmra.mxu0 %v785
      %v891 = vpop.f32.mrf.mxu0
      %v892 = vadd.f32 %v767, %v891
      %v893 = vpop.f32.mrf.mxu0
      %v894 = vadd.f32 %v767, %v893
      %895 = vmatmul.bf16.gmra.mxu0 %v788
      %v896 = vpop.f32.mrf.mxu0
      %v897 = vadd.f32 %v767, %v896
      %v898 = vpop.f32.mrf.mxu0
      %v899 = vadd.f32 %v767, %v898
      %900 = vmatmul.bf16.gmra.mxu0 %v791
      %v901 = vpop.f32.mrf.mxu0
      %v902 = vadd.f32 %v767, %v901
      %v903 = vpop.f32.mrf.mxu0
      %v904 = vadd.f32 %v767, %v903
      %905 = vmatmul.bf16.gmra.mxu0 %v794
      %v906 = vpop.f32.mrf.mxu0
      %v907 = vadd.f32 %v767, %v906
      %v908 = vpop.f32.mrf.mxu0
      %v909 = vadd.f32 %v767, %v908
      %910 = vmatmul.bf16.gmra.mxu0 %v797
      %v911 = vpop.f32.mrf.mxu0
      %v912 = vadd.f32 %v767, %v911
      %v913 = vpop.f32.mrf.mxu0
      %v914 = vadd.f32 %v767, %v913
      %915 = vmatmul.bf16.gmra.mxu0 %v800
      %v916 = vpop.f32.mrf.mxu0
      %v917 = vadd.f32 %v767, %v916
      %v918 = vpop.f32.mrf.mxu0
      %v919 = vadd.f32 %v767, %v918
      %920 = vmatmul.bf16.gmra.mxu0 %v803
      %v921 = vpop.f32.mrf.mxu0
      %v922 = vadd.f32 %v767, %v921
      %v923 = vpop.f32.mrf.mxu0
      %v924 = vadd.f32 %v767, %v923
      %925 = vmatmul.bf16.gmra.mxu0 %v806
      %v926 = vpop.f32.mrf.mxu0
      %v927 = vadd.f32 %v767, %v926
      %v928 = vpop.f32.mrf.mxu0
      %v929 = vadd.f32 %v767, %v928
      %930 = vmatmul.bf16.gmra.mxu0 %v809
      %v931 = vpop.f32.mrf.mxu0
      %v932 = vadd.f32 %v767, %v931
      %v933 = vpop.f32.mrf.mxu0
      %v934 = vadd.f32 %v767, %v933
      %935 = vmatmul.bf16.gmra.mxu0 %v812
      %v936 = vpop.f32.mrf.mxu0
      %v937 = vadd.f32 %v767, %v936
      %v938 = vpop.f32.mrf.mxu0
      %v939 = vadd.f32 %v767, %v938
      %940 = vmatmul.bf16.gmra.mxu0 %v815
      %v941 = vpop.f32.mrf.mxu0
      %v942 = vadd.f32 %v767, %v941
      %v943 = vpop.f32.mrf.mxu0
      %v944 = vadd.f32 %v767, %v943
      %945 = vmatmul.bf16.gmra.mxu0 %v818
      %v946 = vpop.f32.mrf.mxu0
      %v947 = vadd.f32 %v767, %v946
      %v948 = vpop.f32.mrf.mxu0
      %v949 = vadd.f32 %v767, %v948
      %950 = vmatmul.bf16.gmra.mxu0 %v821
      %v951 = vpop.f32.mrf.mxu0
      %v952 = vadd.f32 %v767, %v951
      %v953 = vpop.f32.mrf.mxu0
      %v954 = vadd.f32 %v767, %v953
      %955 = vmatmul.bf16.gmra.mxu0 %v824
      %v956 = vpop.f32.mrf.mxu0
      %v957 = vadd.f32 %v767, %v956
      %v958 = vpop.f32.mrf.mxu0
      %v959 = vadd.f32 %v767, %v958
      %960 = vmatmul.bf16.gmra.mxu0 %v827
      %v961 = vpop.f32.mrf.mxu0
      %v962 = vadd.f32 %v767, %v961
      %v963 = vpop.f32.mrf.mxu0
      %v964 = vadd.f32 %v767, %v963
      %965 = vmatmul.bf16.gmra.mxu0 %v830
      %v966 = vpop.f32.mrf.mxu0
      %v967 = vadd.f32 %v767, %v966
      %v968 = vpop.f32.mrf.mxu0
      %v969 = vadd.f32 %v767, %v968
      %970 = vmatmul.bf16.gmra.mxu0 %v833
      %v971 = vpop.f32.mrf.mxu0
      %v972 = vadd.f32 %v767, %v971
      %v973 = vpop.f32.mrf.mxu0
      %v974 = vadd.f32 %v767, %v973
      %975 = vmatmul.bf16.gmra.mxu0 %v836
      %v976 = vpop.f32.mrf.mxu0
      %v977 = vadd.f32 %v767, %v976
      %v978 = vpop.f32.mrf.mxu0
      %v979 = vadd.f32 %v767, %v978
      %980 = vmatmul.bf16.gmra.mxu0 %v839
      %v981 = vpop.f32.mrf.mxu0
      %v982 = vadd.f32 %v767, %v981
      %v983 = vpop.f32.mrf.mxu0
      %v984 = vadd.f32 %v767, %v983
      %985 = vmatmul.bf16.gmra.mxu0 %v842
      %v986 = vpop.f32.mrf.mxu0
      %v987 = vadd.f32 %v767, %v986
      %v988 = vpop.f32.mrf.mxu0
      %v989 = vadd.f32 %v767, %v988
      %990 = vmatmul.bf16.gmra.mxu0 %v845
      %v991 = vpop.f32.mrf.mxu0
      %v992 = vadd.f32 %v767, %v991
      %v993 = vpop.f32.mrf.mxu0
      %v994 = vadd.f32 %v767, %v993
      %995 = vmatmul.bf16.gmra.mxu0 %v848
      %v996 = vpop.f32.mrf.mxu0
      %v997 = vadd.f32 %v767, %v996
      %v998 = vpop.f32.mrf.mxu0
      %v999 = vadd.f32 %v767, %v998
      %1000 = vmatmul.bf16.gmra.mxu0 %v851
      %v1001 = vpop.f32.mrf.mxu0
      %v1002 = vadd.f32 %v767, %v1001
      %v1003 = vpop.f32.mrf.mxu0
      %v1004 = vadd.f32 %v767, %v1003
      %1005 = vmatmul.bf16.gmra.mxu0 %v854
      %v1006 = vpop.f32.mrf.mxu0
      %v1007 = vadd.f32 %v767, %v1006
      %v1008 = vpop.f32.mrf.mxu0
      %v1009 = vadd.f32 %v767, %v1008
      %1010 = vmatmul.bf16.gmra.mxu0 %v857
      %v1011 = vpop.f32.mrf.mxu0
      %v1012 = vadd.f32 %v767, %v1011
      %v1013 = vpop.f32.mrf.mxu0
      %v1014 = vadd.f32 %v767, %v1013
      %1015 = vmatmul.bf16.gmra.mxu0 %v860
      %v1016 = vpop.f32.mrf.mxu0
      %v1017 = vadd.f32 %v767, %v1016
      %v1018 = vpop.f32.mrf.mxu0
      %v1019 = vadd.f32 %v767, %v1018
      %1020 = vmatmul.bf16.gmra.mxu0 %v863
      %v1021 = vpop.f32.mrf.mxu0
      %v1022 = vadd.f32 %v767, %v1021
      %v1023 = vpop.f32.mrf.mxu0
      %v1024 = vadd.f32 %v767, %v1023
      %1025 = vmatmul.bf16.gmra.mxu0 %v866
      %v1026 = vpop.f32.mrf.mxu0
      %v1027 = vadd.f32 %v767, %v1026
      %v1028 = vpop.f32.mrf.mxu0
      %v1029 = vadd.f32 %v767, %v1028
      %1030 = vmatmul.bf16.gmra.mxu0 %v869
      %v1031 = vpop.f32.mrf.mxu0
      %v1032 = vadd.f32 %v767, %v1031
      %v1033 = vpop.f32.mrf.mxu0
      %v1034 = vadd.f32 %v767, %v1033
      %1035 = vmatmul.bf16.gmra.mxu0 %v872
      %v1036 = vpop.f32.mrf.mxu0
      %v1037 = vadd.f32 %v767, %v1036
      %v1038 = vpop.f32.mrf.mxu0
      %v1039 = vadd.f32 %v767, %v1038
      %1040 = vmatmul.bf16.gmra.mxu0 %v875
      %v1041 = vpop.f32.mrf.mxu0
      %v1042 = vadd.f32 %v767, %v1041
      %v1043 = vpop.f32.mrf.mxu0
      %v1044 = vadd.f32 %v767, %v1043
      %1045 = vdwg.mxu0
      %v1046 = vmax.f32 %v887, 0.0
      %v1047 = vmax.f32 %v889, 0.0
      %v1048 = vmax.f32 %v892, 0.0
      %v1049 = vmax.f32 %v894, 0.0
      %v1050 = vmax.f32 %v897, 0.0
      %v1051 = vmax.f32 %v899, 0.0
      %v1052 = vmax.f32 %v902, 0.0
      %v1053 = vmax.f32 %v904, 0.0
      %v1054 = vmax.f32 %v907, 0.0
      %v1055 = vmax.f32 %v909, 0.0
      %v1056 = vmax.f32 %v912, 0.0
      %v1057 = vmax.f32 %v914, 0.0
      %v1058 = vmax.f32 %v917, 0.0
      %v1059 = vmax.f32 %v919, 0.0
      %v1060 = vmax.f32 %v922, 0.0
      %v1061 = vmax.f32 %v924, 0.0
      %v1062 = vmax.f32 %v927, 0.0
      %v1063 = vmax.f32 %v929, 0.0
      %v1064 = vmax.f32 %v932, 0.0
      %v1065 = vmax.f32 %v934, 0.0
      %v1066 = vmax.f32 %v937, 0.0
      %v1067 = vmax.f32 %v939, 0.0
      %v1068 = vmax.f32 %v942, 0.0
      %v1069 = vmax.f32 %v944, 0.0
      %v1070 = vmax.f32 %v947, 0.0
      %v1071 = vmax.f32 %v949, 0.0
      %v1072 = vmax.f32 %v952, 0.0
      %v1073 = vmax.f32 %v954, 0.0
      %v1074 = vmax.f32 %v957, 0.0
      %v1075 = vmax.f32 %v959, 0.0
      %v1076 = vmax.f32 %v962, 0.0
      %v1077 = vmax.f32 %v964, 0.0
      %v1078 = vmax.f32 %v967, 0.0
      %v1079 = vmax.f32 %v969, 0.0
      %v1080 = vmax.f32 %v972, 0.0
      %v1081 = vmax.f32 %v974, 0.0
      %v1082 = vmax.f32 %v977, 0.0
      %v1083 = vmax.f32 %v979, 0.0
      %v1084 = vmax.f32 %v982, 0.0
      %v1085 = vmax.f32 %v984, 0.0
      %v1086 = vmax.f32 %v987, 0.0
      %v1087 = vmax.f32 %v989, 0.0
      %v1088 = vmax.f32 %v992, 0.0
      %v1089 = vmax.f32 %v994, 0.0
      %v1090 = vmax.f32 %v997, 0.0
      %v1091 = vmax.f32 %v999, 0.0
      %v1092 = vmax.f32 %v1002, 0.0
      %v1093 = vmax.f32 %v1004, 0.0
      %v1094 = vmax.f32 %v1007, 0.0
      %v1095 = vmax.f32 %v1009, 0.0
      %v1096 = vmax.f32 %v1012, 0.0
      %v1097 = vmax.f32 %v1014, 0.0
      %v1098 = vmax.f32 %v1017, 0.0
      %v1099 = vmax.f32 %v1019, 0.0
      %v1100 = vmax.f32 %v1022, 0.0
      %v1101 = vmax.f32 %v1024, 0.0
      %v1102 = vmax.f32 %v1027, 0.0
      %v1103 = vmax.f32 %v1029, 0.0
      %v1104 = vmax.f32 %v1032, 0.0
      %v1105 = vmax.f32 %v1034, 0.0
      %v1106 = vmax.f32 %v1037, 0.0
      %v1107 = vmax.f32 %v1039, 0.0
      %v1108 = vmax.f32 %v1042, 0.0
      %v1109 = vmax.f32 %v1044, 0.0
      %v1110 = vpack.c.bf16 %v1047, %v1046
      %v1111 = vpack.c.bf16 %v1049, %v1048
      %v1112 = vpack.c.bf16 %v1051, %v1050
      %v1113 = vpack.c.bf16 %v1053, %v1052
      %v1114 = vpack.c.bf16 %v1055, %v1054
      %v1115 = vpack.c.bf16 %v1057, %v1056
      %v1116 = vpack.c.bf16 %v1059, %v1058
      %v1117 = vpack.c.bf16 %v1061, %v1060
      %v1118 = vpack.c.bf16 %v1063, %v1062
      %v1119 = vpack.c.bf16 %v1065, %v1064
      %v1120 = vpack.c.bf16 %v1067, %v1066
      %v1121 = vpack.c.bf16 %v1069, %v1068
      %v1122 = vpack.c.bf16 %v1071, %v1070
      %v1123 = vpack.c.bf16 %v1073, %v1072
      %v1124 = vpack.c.bf16 %v1075, %v1074
      %v1125 = vpack.c.bf16 %v1077, %v1076
      %v1126 = vpack.c.bf16 %v1079, %v1078
      %v1127 = vpack.c.bf16 %v1081, %v1080
      %v1128 = vpack.c.bf16 %v1083, %v1082
      %v1129 = vpack.c.bf16 %v1085, %v1084
      %v1130 = vpack.c.bf16 %v1087, %v1086
      %v1131 = vpack.c.bf16 %v1089, %v1088
      %v1132 = vpack.c.bf16 %v1091, %v1090
      %v1133 = vpack.c.bf16 %v1093, %v1092
      %v1134 = vpack.c.bf16 %v1095, %v1094
      %v1135 = vpack.c.bf16 %v1097, %v1096
      %v1136 = vpack.c.bf16 %v1099, %v1098
      %v1137 = vpack.c.bf16 %v1101, %v1100
      %v1138 = vpack.c.bf16 %v1103, %v1102
      %v1139 = vpack.c.bf16 %v1105, %v1104
      %v1140 = vpack.c.bf16 %v1107, %v1106
      %v1141 = vpack.c.bf16 %v1109, %v1108
      %v1142 = vld [vmem:[%s5] sm:$0xf]
      %v1143 = vld [vmem:[%s5 + $0x4] sm:$0xf]
      %v1144 = vld [vmem:[%s5 + $0x8] sm:$0xf]
      %v1145 = vld [vmem:[%s5 + $0xc] sm:$0xf]
      %v1146 = vld [vmem:[%s6] sm:$0x1]
      %v1148 = vperm.slane %v1146, 0
      %v1154 = vunpack.c.l.b16 %v1142
      %v1155 = vunpack.c.l.b16 %v1143
      %v1156 = vunpack.c.l.b16 %v1144
      %v1157 = vunpack.c.l.b16 %v1145
      %v1158 = vpack.c.b16 %v1155, %v1154
      %v1159 = vpack.c.b16 %v1157, %v1156
      %v1163 = vsel %vm399, %v1110, 0
      %v1166 = vsel %vm399, %v1111, 0
      %v1169 = vsel %vm399, %v1112, 0
      %v1172 = vsel %vm399, %v1113, 0
      %v1175 = vsel %vm399, %v1114, 0
      %v1178 = vsel %vm399, %v1115, 0
      %v1181 = vsel %vm399, %v1116, 0
      %v1184 = vsel %vm399, %v1117, 0
      %v1187 = vsel %vm399, %v1118, 0
      %v1190 = vsel %vm399, %v1119, 0
      %v1193 = vsel %vm399, %v1120, 0
      %v1196 = vsel %vm399, %v1121, 0
      %v1199 = vsel %vm399, %v1122, 0
      %v1202 = vsel %vm399, %v1123, 0
      %v1205 = vsel %vm399, %v1124, 0
      %v1208 = vsel %vm399, %v1125, 0
      %v1211 = vsel %vm399, %v1126, 0
      %v1214 = vsel %vm399, %v1127, 0
      %v1217 = vsel %vm399, %v1128, 0
      %v1220 = vsel %vm399, %v1129, 0
      %v1223 = vsel %vm399, %v1130, 0
      %v1226 = vsel %vm399, %v1131, 0
      %v1229 = vsel %vm399, %v1132, 0
      %v1232 = vsel %vm399, %v1133, 0
      %v1235 = vsel %vm399, %v1134, 0
      %v1238 = vsel %vm399, %v1135, 0
      %v1241 = vsel %vm399, %v1136, 0
      %v1244 = vsel %vm399, %v1137, 0
      %v1247 = vsel %vm399, %v1138, 0
      %v1250 = vsel %vm399, %v1139, 0
      %v1253 = vsel %vm399, %v1140, 0
      %v1256 = vsel %vm399, %v1141, 0
      %1258 = vmatpush.bf16.msra.mxu0 0
      %1259 = vmatpush.bf16.msra.mxu0 0
      %1260 = vmatpush.bf16.msra.mxu0 0
      %1261 = vmatpush.bf16.msra.mxu0 0
      %1262 = vmatpush.bf16.msra.mxu0 0
      %1263 = vmatpush.bf16.msra.mxu0 0
      %1264 = vmatpush.bf16.msra.mxu0 %v1159
      %1265 = vmatpush.bf16.msra.mxu0 %v1158
      %1266 = vmatmul.bf16.gmra.mxu0 %v1163
      %v1267 = vpop.f32.mrf.mxu0
      %v1268 = vadd.f32 %v1148, %v1267
      %v1269 = vpop.f32.mrf.mxu0
      %v1270 = vadd.f32 %v1148, %v1269
      %1271 = vmatmul.bf16.gmra.mxu0 %v1166
      %v1272 = vpop.f32.mrf.mxu0
      %v1273 = vadd.f32 %v1148, %v1272
      %v1274 = vpop.f32.mrf.mxu0
      %v1275 = vadd.f32 %v1148, %v1274
      %1276 = vmatmul.bf16.gmra.mxu0 %v1169
      %v1277 = vpop.f32.mrf.mxu0
      %v1278 = vadd.f32 %v1148, %v1277
      %v1279 = vpop.f32.mrf.mxu0
      %v1280 = vadd.f32 %v1148, %v1279
      %1281 = vmatmul.bf16.gmra.mxu0 %v1172
      %v1282 = vpop.f32.mrf.mxu0
      %v1283 = vadd.f32 %v1148, %v1282
      %v1284 = vpop.f32.mrf.mxu0
      %v1285 = vadd.f32 %v1148, %v1284
      %1286 = vmatmul.bf16.gmra.mxu0 %v1175
      %v1287 = vpop.f32.mrf.mxu0
      %v1288 = vadd.f32 %v1148, %v1287
      %v1289 = vpop.f32.mrf.mxu0
      %v1290 = vadd.f32 %v1148, %v1289
      %1291 = vmatmul.bf16.gmra.mxu0 %v1178
      %v1292 = vpop.f32.mrf.mxu0
      %v1293 = vadd.f32 %v1148, %v1292
      %v1294 = vpop.f32.mrf.mxu0
      %v1295 = vadd.f32 %v1148, %v1294
      %1296 = vmatmul.bf16.gmra.mxu0 %v1181
      %v1297 = vpop.f32.mrf.mxu0
      %v1298 = vadd.f32 %v1148, %v1297
      %v1299 = vpop.f32.mrf.mxu0
      %v1300 = vadd.f32 %v1148, %v1299
      %1301 = vmatmul.bf16.gmra.mxu0 %v1184
      %v1302 = vpop.f32.mrf.mxu0
      %v1303 = vadd.f32 %v1148, %v1302
      %v1304 = vpop.f32.mrf.mxu0
      %v1305 = vadd.f32 %v1148, %v1304
      %1306 = vmatmul.bf16.gmra.mxu0 %v1187
      %v1307 = vpop.f32.mrf.mxu0
      %v1308 = vadd.f32 %v1148, %v1307
      %v1309 = vpop.f32.mrf.mxu0
      %v1310 = vadd.f32 %v1148, %v1309
      %1311 = vmatmul.bf16.gmra.mxu0 %v1190
      %v1312 = vpop.f32.mrf.mxu0
      %v1313 = vadd.f32 %v1148, %v1312
      %v1314 = vpop.f32.mrf.mxu0
      %v1315 = vadd.f32 %v1148, %v1314
      %1316 = vmatmul.bf16.gmra.mxu0 %v1193
      %v1317 = vpop.f32.mrf.mxu0
      %v1318 = vadd.f32 %v1148, %v1317
      %v1319 = vpop.f32.mrf.mxu0
      %v1320 = vadd.f32 %v1148, %v1319
      %1321 = vmatmul.bf16.gmra.mxu0 %v1196
      %v1322 = vpop.f32.mrf.mxu0
      %v1323 = vadd.f32 %v1148, %v1322
      %v1324 = vpop.f32.mrf.mxu0
      %v1325 = vadd.f32 %v1148, %v1324
      %1326 = vmatmul.bf16.gmra.mxu0 %v1199
      %v1327 = vpop.f32.mrf.mxu0
      %v1328 = vadd.f32 %v1148, %v1327
      %v1329 = vpop.f32.mrf.mxu0
      %v1330 = vadd.f32 %v1148, %v1329
      %1331 = vmatmul.bf16.gmra.mxu0 %v1202
      %v1332 = vpop.f32.mrf.mxu0
      %v1333 = vadd.f32 %v1148, %v1332
      %v1334 = vpop.f32.mrf.mxu0
      %v1335 = vadd.f32 %v1148, %v1334
      %1336 = vmatmul.bf16.gmra.mxu0 %v1205
      %v1337 = vpop.f32.mrf.mxu0
      %v1338 = vadd.f32 %v1148, %v1337
      %v1339 = vpop.f32.mrf.mxu0
      %v1340 = vadd.f32 %v1148, %v1339
      %1341 = vmatmul.bf16.gmra.mxu0 %v1208
      %v1342 = vpop.f32.mrf.mxu0
      %v1343 = vadd.f32 %v1148, %v1342
      %v1344 = vpop.f32.mrf.mxu0
      %v1345 = vadd.f32 %v1148, %v1344
      %1346 = vmatmul.bf16.gmra.mxu0 %v1211
      %v1347 = vpop.f32.mrf.mxu0
      %v1348 = vadd.f32 %v1148, %v1347
      %v1349 = vpop.f32.mrf.mxu0
      %v1350 = vadd.f32 %v1148, %v1349
      %1351 = vmatmul.bf16.gmra.mxu0 %v1214
      %v1352 = vpop.f32.mrf.mxu0
      %v1353 = vadd.f32 %v1148, %v1352
      %v1354 = vpop.f32.mrf.mxu0
      %v1355 = vadd.f32 %v1148, %v1354
      %1356 = vmatmul.bf16.gmra.mxu0 %v1217
      %v1357 = vpop.f32.mrf.mxu0
      %v1358 = vadd.f32 %v1148, %v1357
      %v1359 = vpop.f32.mrf.mxu0
      %v1360 = vadd.f32 %v1148, %v1359
      %1361 = vmatmul.bf16.gmra.mxu0 %v1220
      %v1362 = vpop.f32.mrf.mxu0
      %v1363 = vadd.f32 %v1148, %v1362
      %v1364 = vpop.f32.mrf.mxu0
      %v1365 = vadd.f32 %v1148, %v1364
      %1366 = vmatmul.bf16.gmra.mxu0 %v1223
      %v1367 = vpop.f32.mrf.mxu0
      %v1368 = vadd.f32 %v1148, %v1367
      %v1369 = vpop.f32.mrf.mxu0
      %v1370 = vadd.f32 %v1148, %v1369
      %1371 = vmatmul.bf16.gmra.mxu0 %v1226
      %v1372 = vpop.f32.mrf.mxu0
      %v1373 = vadd.f32 %v1148, %v1372
      %v1374 = vpop.f32.mrf.mxu0
      %v1375 = vadd.f32 %v1148, %v1374
      %1376 = vmatmul.bf16.gmra.mxu0 %v1229
      %v1377 = vpop.f32.mrf.mxu0
      %v1378 = vadd.f32 %v1148, %v1377
      %v1379 = vpop.f32.mrf.mxu0
      %v1380 = vadd.f32 %v1148, %v1379
      %1381 = vmatmul.bf16.gmra.mxu0 %v1232
      %v1382 = vpop.f32.mrf.mxu0
      %v1383 = vadd.f32 %v1148, %v1382
      %v1384 = vpop.f32.mrf.mxu0
      %v1385 = vadd.f32 %v1148, %v1384
      %1386 = vmatmul.bf16.gmra.mxu0 %v1235
      %v1387 = vpop.f32.mrf.mxu0
      %v1388 = vadd.f32 %v1148, %v1387
      %v1389 = vpop.f32.mrf.mxu0
      %v1390 = vadd.f32 %v1148, %v1389
      %1391 = vmatmul.bf16.gmra.mxu0 %v1238
      %v1392 = vpop.f32.mrf.mxu0
      %v1393 = vadd.f32 %v1148, %v1392
      %v1394 = vpop.f32.mrf.mxu0
      %v1395 = vadd.f32 %v1148, %v1394
      %1396 = vmatmul.bf16.gmra.mxu0 %v1241
      %v1397 = vpop.f32.mrf.mxu0
      %v1398 = vadd.f32 %v1148, %v1397
      %v1399 = vpop.f32.mrf.mxu0
      %v1400 = vadd.f32 %v1148, %v1399
      %1401 = vmatmul.bf16.gmra.mxu0 %v1244
      %v1402 = vpop.f32.mrf.mxu0
      %v1403 = vadd.f32 %v1148, %v1402
      %v1404 = vpop.f32.mrf.mxu0
      %v1405 = vadd.f32 %v1148, %v1404
      %1406 = vmatmul.bf16.gmra.mxu0 %v1247
      %v1407 = vpop.f32.mrf.mxu0
      %v1408 = vadd.f32 %v1148, %v1407
      %v1409 = vpop.f32.mrf.mxu0
      %v1410 = vadd.f32 %v1148, %v1409
      %1411 = vmatmul.bf16.gmra.mxu0 %v1250
      %v1412 = vpop.f32.mrf.mxu0
      %v1413 = vadd.f32 %v1148, %v1412
      %v1414 = vpop.f32.mrf.mxu0
      %v1415 = vadd.f32 %v1148, %v1414
      %1416 = vmatmul.bf16.gmra.mxu0 %v1253
      %v1417 = vpop.f32.mrf.mxu0
      %v1418 = vadd.f32 %v1148, %v1417
      %v1419 = vpop.f32.mrf.mxu0
      %v1420 = vadd.f32 %v1148, %v1419
      %1421 = vmatmul.bf16.gmra.mxu0 %v1256
      %v1422 = vpop.f32.mrf.mxu0
      %v1423 = vadd.f32 %v1148, %v1422
      %v1424 = vpop.f32.mrf.mxu0
      %v1425 = vadd.f32 %v1148, %v1424
      %1426 = vdwg.mxu0
      %vm1427 = vcmask 130048
      %1428 = vst.msk [vmem:[%s280] sm:$0xff] %vm1427, %v1268
      %1429 = vst.msk [vmem:[%s280 + $0x8] sm:$0xff] %vm1427, %v1270
      %1430 = vst.msk [vmem:[%s280 + $0x10] sm:$0xff] %vm1427, %v1273
      %1431 = vst.msk [vmem:[%s280 + $0x18] sm:$0xff] %vm1427, %v1275
      %1432 = vst.msk [vmem:[%s280 + $0x20] sm:$0xff] %vm1427, %v1278
      %1433 = vst.msk [vmem:[%s280 + $0x28] sm:$0xff] %vm1427, %v1280
      %1434 = vst.msk [vmem:[%s280 + $0x30] sm:$0xff] %vm1427, %v1283
      %1435 = vst.msk [vmem:[%s280 + $0x38] sm:$0xff] %vm1427, %v1285
      %1436 = vst.msk [vmem:[%s280 + $0x40] sm:$0xff] %vm1427, %v1288
      %1437 = vst.msk [vmem:[%s280 + $0x48] sm:$0xff] %vm1427, %v1290
      %1438 = vst.msk [vmem:[%s280 + $0x50] sm:$0xff] %vm1427, %v1293
      %1439 = vst.msk [vmem:[%s280 + $0x58] sm:$0xff] %vm1427, %v1295
      %1440 = vst.msk [vmem:[%s280 + $0x60] sm:$0xff] %vm1427, %v1298
      %1441 = vst.msk [vmem:[%s280 + $0x68] sm:$0xff] %vm1427, %v1300
      %1442 = vst.msk [vmem:[%s280 + $0x70] sm:$0xff] %vm1427, %v1303
      %1443 = vst.msk [vmem:[%s280 + $0x78] sm:$0xff] %vm1427, %v1305
      %1444 = vst.msk [vmem:[%s280 + $0x80] sm:$0xff] %vm1427, %v1308
      %1445 = vst.msk [vmem:[%s280 + $0x88] sm:$0xff] %vm1427, %v1310
      %1446 = vst.msk [vmem:[%s280 + $0x90] sm:$0xff] %vm1427, %v1313
      %1447 = vst.msk [vmem:[%s280 + $0x98] sm:$0xff] %vm1427, %v1315
      %1448 = vst.msk [vmem:[%s280 + $0xa0] sm:$0xff] %vm1427, %v1318
      %1449 = vst.msk [vmem:[%s280 + $0xa8] sm:$0xff] %vm1427, %v1320
      %1450 = vst.msk [vmem:[%s280 + $0xb0] sm:$0xff] %vm1427, %v1323
      %1451 = vst.msk [vmem:[%s280 + $0xb8] sm:$0xff] %vm1427, %v1325
      %1452 = vst.msk [vmem:[%s280 + $0xc0] sm:$0xff] %vm1427, %v1328
      %1453 = vst.msk [vmem:[%s280 + $0xc8] sm:$0xff] %vm1427, %v1330
      %1454 = vst.msk [vmem:[%s280 + $0xd0] sm:$0xff] %vm1427, %v1333
      %1455 = vst.msk [vmem:[%s280 + $0xd8] sm:$0xff] %vm1427, %v1335
      %1456 = vst.msk [vmem:[%s280 + $0xe0] sm:$0xff] %vm1427, %v1338
      %1457 = vst.msk [vmem:[%s280 + $0xe8] sm:$0xff] %vm1427, %v1340
      %1458 = vst.msk [vmem:[%s280 + $0xf0] sm:$0xff] %vm1427, %v1343
      %1459 = vst.msk [vmem:[%s280 + $0xf8] sm:$0xff] %vm1427, %v1345
      %1460 = vst.msk [vmem:[%s280 + $0x100] sm:$0xff] %vm1427, %v1348
      %1461 = vst.msk [vmem:[%s280 + $0x108] sm:$0xff] %vm1427, %v1350
      %1462 = vst.msk [vmem:[%s280 + $0x110] sm:$0xff] %vm1427, %v1353
      %1463 = vst.msk [vmem:[%s280 + $0x118] sm:$0xff] %vm1427, %v1355
      %1464 = vst.msk [vmem:[%s280 + $0x120] sm:$0xff] %vm1427, %v1358
      %1465 = vst.msk [vmem:[%s280 + $0x128] sm:$0xff] %vm1427, %v1360
      %1466 = vst.msk [vmem:[%s280 + $0x130] sm:$0xff] %vm1427, %v1363
      %1467 = vst.msk [vmem:[%s280 + $0x138] sm:$0xff] %vm1427, %v1365
      %1468 = vst.msk [vmem:[%s280 + $0x140] sm:$0xff] %vm1427, %v1368
      %1469 = vst.msk [vmem:[%s280 + $0x148] sm:$0xff] %vm1427, %v1370
      %1470 = vst.msk [vmem:[%s280 + $0x150] sm:$0xff] %vm1427, %v1373
      %1471 = vst.msk [vmem:[%s280 + $0x158] sm:$0xff] %vm1427, %v1375
      %1472 = vst.msk [vmem:[%s280 + $0x160] sm:$0xff] %vm1427, %v1378
      %1473 = vst.msk [vmem:[%s280 + $0x168] sm:$0xff] %vm1427, %v1380
      %1474 = vst.msk [vmem:[%s280 + $0x170] sm:$0xff] %vm1427, %v1383
      %1475 = vst.msk [vmem:[%s280 + $0x178] sm:$0xff] %vm1427, %v1385
      %1476 = vst.msk [vmem:[%s280 + $0x180] sm:$0xff] %vm1427, %v1388
      %1477 = vst.msk [vmem:[%s280 + $0x188] sm:$0xff] %vm1427, %v1390
      %1478 = vst.msk [vmem:[%s280 + $0x190] sm:$0xff] %vm1427, %v1393
      %1479 = vst.msk [vmem:[%s280 + $0x198] sm:$0xff] %vm1427, %v1395
      %1480 = vst.msk [vmem:[%s280 + $0x1a0] sm:$0xff] %vm1427, %v1398
      %1481 = vst.msk [vmem:[%s280 + $0x1a8] sm:$0xff] %vm1427, %v1400
      %1482 = vst.msk [vmem:[%s280 + $0x1b0] sm:$0xff] %vm1427, %v1403
      %1483 = vst.msk [vmem:[%s280 + $0x1b8] sm:$0xff] %vm1427, %v1405
      %1484 = vst.msk [vmem:[%s280 + $0x1c0] sm:$0xff] %vm1427, %v1408
      %1485 = vst.msk [vmem:[%s280 + $0x1c8] sm:$0xff] %vm1427, %v1410
      %1486 = vst.msk [vmem:[%s280 + $0x1d0] sm:$0xff] %vm1427, %v1413
      %1487 = vst.msk [vmem:[%s280 + $0x1d8] sm:$0xff] %vm1427, %v1415
      %1488 = vst.msk [vmem:[%s280 + $0x1e0] sm:$0xff] %vm1427, %v1418
      %1489 = vst.msk [vmem:[%s280 + $0x1e8] sm:$0xff] %vm1427, %v1420
      %1490 = vst.msk [vmem:[%s280 + $0x1f0] sm:$0xff] %vm1427, %v1423
      %1491 = vst.msk [vmem:[%s280 + $0x1f8] sm:$0xff] %vm1427, %v1425
      %s1492 = smul.u32 64, %s18
      %p1493 = scmp.lt.s32.totalorder %s1492, 127
      %s1494 = scalar_select %p1493, %s1492, 127
      %s1495 = smul.addr %s1494, 8
      %s1496 = scalar_lea.vmem %s7, %s1495
      // Predicated region
      $region49: #{mlp_forward.1} parent=47 // pred_check
        %p1497 = pneg %p188
      $region50: #{mlp_forward.1} parent=47 // pred_check_branch
        %1499 = sbr.rel (%p1497) target = $region52
      $region51: #{mlp_forward.1} parent=47 // pred_region
        %s1500 = smul.u32 64, %s18
      $region52: #{mlp_forward.1} parent=47 // pred_fallthru
        _
    $region48: #{mlp_forward.1} parent=5 // pred_fallthru
      _
    %p1501 = scmp.le.s32.totalorder 2, %s13
    // Predicated region
    $region53: #{mlp_forward.1} parent=5 // pred_check
      %p1502 = pneg %p1501
    $region54: #{mlp_forward.1} parent=5 // pred_check_branch
      %1504 = sbr.rel (%p1502) target = $region56
    $region55: #{mlp_forward.1} parent=5 // pred_region
      %s1505 = ssub.s32 %s13, 2
      // Predicated region
      $region57: #{mlp_forward.1} parent=55 // pred_check
        %p1506 = pneg %p194
      $region58: #{mlp_forward.1} parent=55 // pred_check_branch
        %1508 = sbr.rel (%p1506) target = $region60
      $region59: #{mlp_forward.1} parent=55 // pred_region
        %s1509 = smul.u32 64, %s19
        %p1510 = scmp.lt.s32.totalorder %s1509, 127
        %s1511 = scalar_select %p1510, %s1509, 127
        %s1512 = smul.addr %s1511, 8
        %s1513 = scalar_lea.vmem %s7, %s1512
      $region60: #{mlp_forward.1} parent=55 // pred_fallthru
        _
    $region56: #{mlp_forward.1} parent=5 // pred_fallthru
      _
  $region6: #{mlp_forward.1} parent=0 // loop_footer
    %s17 = sadd.s32 1, %s13
  $region7: #{mlp_forward.1} parent=0 // loop_footer_branch
    %12 = sbr.rel target = $region3
  $region8: #{mlp_forward.1} parent=0 // loop_exit
    _

</llo_original>
